<compile_context>
chip_gen: v7x
topology: tpu7x:2x2x1
jax: 0.10.0
libtpu: 0.0.40
codegen_flags: <defaults>
</compile_context>

<pallas_src>
import math
import functools

import jax
import jax.numpy as jnp
from jax.experimental import pallas as pl
from jax.experimental.pallas import tpu as pltpu


def make_positional_encoding(d_model: int, max_len: int = 250) -> jnp.ndarray:
    """Sinusoidal PE table, identical math to the PyTorch __init__."""
    position = jnp.arange(0, max_len, dtype=jnp.float32)[:, None]            # (max_len, 1)
    div_term = jnp.exp(
        jnp.arange(0, d_model, 2, dtype=jnp.float32) * (-(math.log(10000.0) / d_model))
    )                                                                         # (ceil(d/2),)
    pe = jnp.zeros((max_len, d_model), dtype=jnp.float32)
    pe = pe.at[:, 0::2].set(jnp.sin(position * div_term))
    pe = pe.at[:, 1::2].set(jnp.cos(position * div_term)[:, : d_model // 2])
    return pe                                                                 # (max_len, d_model)


def _pe_add_kernel(src_ref, pe_ref, out_ref):
    """Eval path: out = src + pe (pe broadcast over the batch rows)."""
    out_ref[...] = (src_ref[...] + pe_ref[...]).astype(out_ref.dtype)


def _pe_add_dropout_kernel(src_ref, pe_ref, bits_ref, out_ref, *, p):
    """Training path: out = inverted_dropout(src + pe, p).

    Keep-test is done in integer space (uint32 bits >= p * 2^32): no shift,
    no int->float convert, no 1/2^24 multiply -- just one compare + select.
    """
    x = src_ref[...] + pe_ref[...]                                # (Bt, LD) + (1, LD)
    threshold = jnp.uint32(min(int(p * 4294967296.0), 4294967295))
    keep = bits_ref[...] >= threshold
    scale = jnp.float32(1.0 / (1.0 - p))
    out_ref[...] = jnp.where(keep, x * scale, jnp.zeros_like(x)).astype(out_ref.dtype)


def _choose_row_tile(n_rows: int, row_bytes: int, target_bytes: int = 4 << 20) -> int:
    """Pick how many batch rows go in one block, targeting ~4 MiB per buffer.

    Result is either n_rows (whole batch fits / batch is small) or a multiple of
    8 that divides n_rows, so the BlockSpec (8,128) tiling constraint holds and
    the grid has no ragged final block.
    """
    rows = max(1, target_bytes // max(1, row_bytes))
    if rows >= n_rows:
        return n_rows
    bt = (rows // 8) * 8
    while bt >= 8 and n_rows % bt != 0:
        bt -= 8
    return bt if bt >= 8 else n_rows


def positional_encoding_forward(
    src: jnp.ndarray,
    pe_table: jnp.ndarray,
    *,
    dropout_p: float = 0.1,
    training: bool = True,
    rng_key=None,
) -> jnp.ndarray:
    """src: (B, L, D).  Returns dropout(src + pe[:L]) with the same shape/dtype."""
    B, L, D = src.shape
    LD = L * D

    # Lane-dense layout: fold (L, D) into one wide last axis.  The PE broadcast
    # over batch is preserved because rows of src and pe flatten identically.
    src2 = src.reshape(B, LD)
    pe2 = pe_table[:L, :].reshape(1, LD).astype(src.dtype)

    itemsize = jnp.dtype(src.dtype).itemsize
    Bt = _choose_row_tile(B, LD * itemsize)
    grid = (B // Bt,)

    src_spec = pl.BlockSpec((Bt, LD), lambda i: (i, 0))
    pe_spec = pl.BlockSpec((1, LD), lambda i: (0, 0))     # same small tile every step
    out_spec = pl.BlockSpec((Bt, LD), lambda i: (i, 0))
    out_shape = jax.ShapeDtypeStruct((B, LD), src.dtype)
    # Grid steps are fully independent (randomness comes from the per-element
    # bits array), so "parallel" lets v7x shard the axis across both TCs.
    cparams = pltpu.CompilerParams(dimension_semantics=("parallel",))

    use_dropout = training and dropout_p > 0.0
    if use_dropout:
        if rng_key is None:
            rng_key = jax.random.PRNGKey(0)
        bits = jax.random.bits(rng_key, (B, LD), dtype=jnp.uint32)
        bits_spec = pl.BlockSpec((Bt, LD), lambda i: (i, 0))
        cost = pl.CostEstimate(
            flops=3 * B * LD,
            transcendentals=0,
            bytes_accessed=(2 * B * LD + LD) * itemsize + B * LD * 4,
        )
        kernel = functools.partial(_pe_add_dropout_kernel, p=float(dropout_p))
        out2 = pl.pallas_call(
            kernel,
            out_shape=out_shape,
            grid=grid,
            in_specs=[src_spec, pe_spec, bits_spec],
            out_specs=out_spec,
            compiler_params=cparams,
            cost_estimate=cost,
        )(src2, pe2, bits)
    else:
        cost = pl.CostEstimate(
            flops=B * LD,
            transcendentals=0,
            bytes_accessed=(2 * B * LD + LD) * itemsize,
        )
        out2 = pl.pallas_call(
            _pe_add_kernel,
            out_shape=out_shape,
            grid=grid,
            in_specs=[src_spec, pe_spec],
            out_specs=out_spec,
            compiler_params=cparams,
            cost_estimate=cost,
        )(src2, pe2)

    return out2.reshape(B, L, D)


if __name__ == "__main__":
    B, L, D = 2, 8, 32
    max_len = 250
    dropout_p = 0.1

    root = jax.random.PRNGKey(0)
    data_key, drop_key = jax.random.split(root)
    src = jax.random.normal(data_key, (B, L, D), dtype=jnp.float32)

    pe_table = make_positional_encoding(D, max_len)
    ref_eval = src + pe_table[None, :L, :]

    # Eval-mode forward (dropout = identity) -> exact reference check.
    out_eval = positional_encoding_forward(
        src, pe_table, dropout_p=dropout_p, training=False
    )
    out_eval = jax.block_until_ready(out_eval)
    assert out_eval.shape == (B, L, D) and out_eval.dtype == jnp.float32
    assert jnp.allclose(out_eval, ref_eval, atol=1e-6), "eval-mode mismatch"

    # Training-mode forward (inverted dropout active).
    out_train = positional_encoding_forward(
        src, pe_table, dropout_p=dropout_p, training=True, rng_key=drop_key
    )
    out_train = jax.block_until_ready(out_train)
    assert out_train.shape == (B, L, D) and out_train.dtype == jnp.float32

    # Kept elements must equal (src + pe) / (1 - p); dropped elements are zero.
    scale = 1.0 / (1.0 - dropout_p)
    dropped = out_train == 0.0
    matches = jnp.where(dropped, True, jnp.isclose(out_train, ref_eval * scale, atol=1e-5))
    assert bool(jnp.all(matches)), "training-mode kept values mismatch"
    frac = float(jnp.mean(dropped.astype(jnp.float32)))
    assert 0.0 < frac < 0.35, f"implausible drop fraction {frac}"

    print("KERNEL_OK")
</pallas_src>

<mosaic_0001>
module attributes {stable_mosaic.version = 11 : i64} {
  func.func @_pe_add_kernel(%arg0: i32, %arg1: memref<2x256xf32, #tpu.memory_space<vmem>>, %arg2: memref<1x256xf32, #tpu.memory_space<vmem>>, %arg3: memref<2x256xf32, #tpu.memory_space<vmem>>) attributes {dimension_semantics = [#tpu.dimension_semantics<parallel>], iteration_bounds = array<i64: 1>, scalar_prefetch = 0 : i64, scratch_operands = 0 : i64, tpu.core_type = #tpu.core_type<tc>, window_params = [{transform_indices = @transform_0, window_bounds = array<i64: 2, 256>}, {pipeline_mode = #tpu.pipeline_mode<synchronous>, transform_indices = @transform_1, window_bounds = array<i64: 1, 256>}, {transform_indices = @transform_2, window_bounds = array<i64: 2, 256>}]} {
    %c0 = arith.constant 0 : index
    %c0_0 = arith.constant 0 : index
    %0 = vector.load %arg1[%c0, %c0_0] : memref<2x256xf32, #tpu.memory_space<vmem>>, vector<2x256xf32>
    %c0_1 = arith.constant 0 : index
    %c0_2 = arith.constant 0 : index
    %1 = vector.load %arg2[%c0_1, %c0_2] : memref<1x256xf32, #tpu.memory_space<vmem>>, vector<1x256xf32>
    %2 = vector.broadcast %1 : vector<1x256xf32> to vector<2x256xf32>
    %3 = arith.addf %0, %2 : vector<2x256xf32>
    %c0_3 = arith.constant 0 : index
    %c0_4 = arith.constant 0 : index
    %4 = vector.load %arg3[%c0_3, %c0_4] : memref<2x256xf32, #tpu.memory_space<vmem>>, vector<2x256xf32>
    tpu.vector_store %arg3[%c0_3, %c0_4], %3 {strides = array<i32>} : memref<2x256xf32, #tpu.memory_space<vmem>>, vector<2x256xf32>,
    return
  }
  func.func @transform_0(%arg0: i32) -> (i32, i32) {
    %c0_i32 = arith.constant 0 : i32
    %c0_i32_0 = arith.constant 0 : i32
    return %arg0, %c0_i32 : i32, i32
  }
  func.func @transform_1(%arg0: i32) -> (i32, i32) {
    %c0_i32 = arith.constant 0 : i32
    %c0_i32_0 = arith.constant 0 : i32
    %c0_i32_1 = arith.constant 0 : i32
    return %c0_i32, %c0_i32_0 : i32, i32
  }
  func.func @transform_2(%arg0: i32) -> (i32, i32) {
    %c0_i32 = arith.constant 0 : i32
    %c0_i32_0 = arith.constant 0 : i32
    return %arg0, %c0_i32 : i32, i32
  }
}

</mosaic_0001>

<llo_original>
// kernel: tpu_custom_call.1
$region0: #{tpu_custom_call.1}
  #allocation0 [shape = 'u32[]', space=smem, size = 0x4, offset = 0x4, fixed_abs, tag = 'smem constant byte address 0x4 - core index']
  #allocation1 [shape = 'u32[144,128]{1,0:T(1,128)}', space=vmem, size = 0x12000, scoped, tag = 'internal scratch']
  %s0 = inlined_call_operand.hbm [shape: f32[2,256], index: 0, kind: input, shape index: {}]
  %s1 = inlined_call_operand.vmem [shape: f32[1,256], index: 1, kind: input, shape index: {}]
  %s2 = inlined_call_operand.hbm [shape: f32[2,256], index: 2, kind: output, shape index: {}]
  %s3 = sld [smem:[#allocation0]]
  $region22: #{tpu_custom_call.1} parent=0
    _
  %s5 = ssub.s32 1, %s3
  %s6 = scalar_select 0, %s5, %s3
  $region1: #{tpu_custom_call.1} parent=0
    #allocation2 [shape = 'u8[2048]{0}', space=vmem, size = 0x800, scoped, tag = 'input window, operand 0, single buffered']
    #allocation3 [shape = 's32[1]{0}', space=sflag, size = 0x4, scoped, tag = 'scoped memory for tpu_custom_call.1']
    #allocation4 [shape = 's32[1]{0}', space=sflag, size = 0x4, scoped, tag = 'scoped memory for tpu_custom_call.1']
    #allocation5 [shape = 'u8[2048]{0}', space=vmem, size = 0x800, scoped, tag = 'output window, operand 0, single buffered']
    %7 = vsyncpa [#allocation3], 0
    %8 = vsyncpa [#allocation4], 0
    // Predicated region
    $region2: #{tpu_custom_call.1} parent=1 // pred_check
      _
    $region3: #{tpu_custom_call.1} parent=1 // pred_check_branch
      %10 = sbr.rel (0) target = $region5
    $region4: #{tpu_custom_call.1} parent=1 // pred_region
      %s12 = ssub.s32 64, 64
      %13 = vsyncadd [#allocation3], %s12
      %s15 = sshll.u32 [#allocation2], 4
      %s16 = int_to_ptr.vmem [resolvable:$true] %s15
      %18 = dma.hbm_to_vmem [thread:$0]  %s0, 64, %s16, [#allocation3]
    $region5: #{tpu_custom_call.1} parent=1 // pred_fallthru
      _
    // Predicated region
    $region6: #{tpu_custom_call.1} parent=1 // pred_check
      _
    $region7: #{tpu_custom_call.1} parent=1 // pred_check_branch
      %20 = sbr.rel (0) target = $region9
    $region8: #{tpu_custom_call.1} parent=1 // pred_region
      _
    $region9: #{tpu_custom_call.1} parent=1 // pred_fallthru
      _
    // Predicated region
    $region10: #{tpu_custom_call.1} parent=1 // pred_check
      _
    $region11: #{tpu_custom_call.1} parent=1 // pred_check_branch
      %22 = sbr.rel (0) target = $region13
    $region12: #{tpu_custom_call.1} parent=1 // pred_region
      %23 = dma.done [#allocation3], 64
    $region13: #{tpu_custom_call.1} parent=1 // pred_fallthru
      _
    %v24 = vld [vmem:[#allocation2] sm:$0xf]
    %v25 = vld [vmem:[%s1] sm:$0x3]
    %v27 = vlaneseq
    %v28 = vshrl.u32 %v27, 7
    %v29 = vsub.s32 0, %v28
    %v30 = vrot.slane %v25, %v29
    %v31 = vlaneseq
    %v32 = vshrl.u32 %v31, 7
    %v33 = vsub.s32 1, %v32
    %v34 = vrot.slane %v25, %v33
    %v35 = vcombine.low %v30, %v34
    %v37 = vunpack.c.l.s4 1983009808
    %v38 = vunpack.c.0.s8 %v37
    %v39 = vlaneseq
    %v40 = vshrl.u32 %v39, 7
    %v41 = vsub.s32 %v38, %v40
    %v42 = vrot.slane %v35, %v41
    %v44 = vadd.f32 %v24, %v42
    %45 = vst [vmem:[#allocation5] sm:$0xf] %v44
    // Predicated region
    $region14: #{tpu_custom_call.1} parent=1 // pred_check
      _
    $region15: #{tpu_custom_call.1} parent=1 // pred_check_branch
      %47 = sbr.rel (0) target = $region17
    $region16: #{tpu_custom_call.1} parent=1 // pred_region
      %s49 = ssub.s32 64, 64
      %50 = vsyncadd [#allocation4], %s49
      %s52 = sshll.u32 [#allocation5], 4
      %s53 = int_to_ptr.vmem [resolvable:$true] %s52
      %55 = dma.vmem_to_hbm [thread:$0]  %s53, 64, %s2, [#allocation4]
    $region17: #{tpu_custom_call.1} parent=1 // pred_fallthru
      _
    // Predicated region
    $region18: #{tpu_custom_call.1} parent=1 // pred_check
      _
    $region19: #{tpu_custom_call.1} parent=1 // pred_check_branch
      %57 = sbr.rel (0) target = $region21
    $region20: #{tpu_custom_call.1} parent=1 // pred_region
      %58 = dma.done [#allocation4], 64
    $region21: #{tpu_custom_call.1} parent=1 // pred_fallthru
      _
    %59 = vsyncpa [#allocation3], 1
    %60 = vsyncpa [#allocation4], 1

</llo_original>
